<compile_context>
chip_gen: v7x
topology: tpu7x:2x2x1
jax: 0.10.0
libtpu: 0.0.40
codegen_flags: <defaults>
</compile_context>

<pallas_src>
import math

import jax
import jax.numpy as jnp
from jax.experimental import pallas as pl
from jax.experimental.pallas import tpu as pltpu


def _round_up(n, m):
    return ((n + m - 1) // m) * m


def _prod(dims):
    if isinstance(dims, int):
        return dims
    return int(math.prod(dims))


def _fused_proj_kernel(x_ref, w_ref, b_ref, o_ref):
    # x_ref: (TM, D)  current batch tile of the flattened input
    # w_ref: (D, N)   all P projection weights concatenated along columns
    # b_ref: (1, N)   all P biases concatenated
    # o_ref: (TM, N)  fused output tile
    y = jnp.dot(x_ref[...], w_ref[...], preferred_element_type=jnp.float32)
    o_ref[...] = (y + b_ref[...]).astype(o_ref.dtype)


@jax.jit
def ortho_projection_forward(x, w_fused, b_fused):
    """x: (B, D) f32; w_fused: (D, N) f32; b_fused: (1, N) f32 -> (B, N) f32."""
    B, D = x.shape
    N = w_fused.shape[1]

    # Batch tile: large enough to pipeline DMA against the MXU, small enough
    # to double-buffer comfortably under every generation's VMEM budget.
    TM = min(512, _round_up(max(B, 1), 8))
    grid = (pl.cdiv(B, TM),)

    cost = pl.CostEstimate(
        flops=2 * B * D * N,
        transcendentals=0,
        bytes_accessed=4 * (B * D + D * N + B * N + N),
    )

    return pl.pallas_call(
        _fused_proj_kernel,
        out_shape=jax.ShapeDtypeStruct((B, N), jnp.float32),
        grid=grid,
        in_specs=[
            pl.BlockSpec((TM, D), lambda i: (i, 0)),   # batch-tiled input
            pl.BlockSpec((D, N), lambda i: (0, 0)),    # weights: VMEM-resident
            pl.BlockSpec((1, N), lambda i: (0, 0)),    # bias: VMEM-resident
        ],
        out_specs=pl.BlockSpec((TM, N), lambda i: (i, 0)),
        compiler_params=pltpu.CompilerParams(
            dimension_semantics=("parallel",),
        ),
        cost_estimate=cost,
    )(x, w_fused, b_fused)


def make_ortho_params(key, n_projections, in_dim, out_dim):
    """Deterministic parameters mimicking nn.Linear + geotorch.orthogonal.

    Each weight (out_dim, in_dim) has orthonormal rows (out_dim <= in_dim).
    We build W^T of shape (in_dim, out_dim) with orthonormal columns via QR.
    Returned w_stack is already transposed: (P, in_dim, out_dim).
    """
    # TODO(synk): geotorch's orthogonal parametrization is only mimicked here
    # (QR init); it is a parameter-construction detail, not a forward-pass op.
    keys = jax.random.split(key, n_projections + 1)
    w_t = []
    for i in range(n_projections):
        a = jax.random.normal(keys[i], (in_dim, out_dim), dtype=jnp.float32)
        q, _ = jnp.linalg.qr(a)  # (in_dim, out_dim), orthonormal columns
        w_t.append(q)
    w_stack = jnp.stack(w_t, axis=0)  # (P, D, O)
    # nn.Linear default bias init: uniform(-1/sqrt(fan_in), 1/sqrt(fan_in))
    bound = 1.0 / jnp.sqrt(jnp.float32(in_dim))
    b_stack = jax.random.uniform(
        keys[-1], (n_projections, out_dim), dtype=jnp.float32,
        minval=-bound, maxval=bound,
    )
    return w_stack, b_stack


class OrthoProjectionModelPallas:
    """Mirrors OrthoProjectionModel.forward: returns a list of P (B, O) outputs."""

    def __init__(self, input_dims=32, n_projections=6, out_dim=16, key=None):
        self.n_input_dims = _prod(input_dims)
        self.n_projections = n_projections
        self.out_dim = out_dim
        if key is None:
            key = jax.random.PRNGKey(0)
        # Per-projection params (kept for reference checking).
        self.w_stack, self.b_stack = make_ortho_params(
            key, n_projections, self.n_input_dims, out_dim
        )
        # Fuse all projections into one weight/bias slab: column p*O + o
        # corresponds to projection p, output feature o.
        D = self.n_input_dims
        P, O = n_projections, out_dim
        N = P * O
        self.w_fused = jnp.transpose(self.w_stack, (1, 0, 2)).reshape(D, N)
        self.b_fused = self.b_stack.reshape(1, N)

    def __call__(self, x):
        # flatten = View((-1, n_input_dims))
        x2 = x.reshape(-1, self.n_input_dims).astype(jnp.float32)
        y = ortho_projection_forward(x2, self.w_fused, self.b_fused)
        # Single free reshape; per-projection views sliced lazily.
        y3 = y.reshape(y.shape[0], self.n_projections, self.out_dim)
        return [y3[:, i, :] for i in range(self.n_projections)]


if __name__ == "__main__":
    key = jax.random.PRNGKey(0)
    k_param, k_x = jax.random.split(key)

    # Small shapes consistent with the module: x has trailing dims input_dims,
    # flattened to (-1, n_input_dims), then P linears of out_dim.
    B = 4
    input_dims = (4, 8)   # n_input_dims = 32
    P, O = 6, 16
    model = OrthoProjectionModelPallas(
        input_dims=input_dims, n_projections=P, out_dim=O, key=k_param
    )
    x = jax.random.normal(k_x, (B,) + input_dims, dtype=jnp.float32)

    outputs = model(x)
    outputs = [jax.block_until_ready(o) for o in outputs]

    # Reference check in plain JAX (x_flat @ W_p^T + b_p, W_p^T == w_stack[p]).
    x_flat = x.reshape(B, model.n_input_dims)
    for i in range(P):
        ref = x_flat @ model.w_stack[i] + model.b_stack[i]
        assert jnp.allclose(outputs[i], ref, atol=1e-5, rtol=1e-5), (
            f"mismatch vs reference in projection {i}"
        )
    assert len(outputs) == P and outputs[0].shape == (B, O)

    # Larger batch so the batch grid actually tiles (grid > 1, partial-block-free).
    B2 = 1024
    x_big = jax.random.normal(jax.random.PRNGKey(1), (B2,) + input_dims,
                              dtype=jnp.float32)
    outs_big = model(x_big)
    jax.block_until_ready(outs_big[0])
    ref0 = x_big.reshape(B2, model.n_input_dims) @ model.w_stack[0] + model.b_stack[0]
    assert jnp.allclose(outs_big[0], ref0, atol=1e-4, rtol=1e-4)

    print("KERNEL_OK")
</pallas_src>

<mosaic_0001>
module attributes {stable_mosaic.version = 11 : i64} {
  func.func @_fused_proj_kernel(%arg0: i32, %arg1: memref<8x32xf32, #tpu.memory_space<vmem>>, %arg2: memref<32x96xf32, #tpu.memory_space<vmem>>, %arg3: memref<1x96xf32, #tpu.memory_space<vmem>>, %arg4: memref<8x96xf32, #tpu.memory_space<vmem>>) attributes {dimension_semantics = [#tpu.dimension_semantics<parallel>], iteration_bounds = array<i64: 1>, scalar_prefetch = 0 : i64, scratch_operands = 0 : i64, tpu.core_type = #tpu.core_type<tc>, window_params = [{transform_indices = @transform_0, window_bounds = array<i64: 8, 32>}, {pipeline_mode = #tpu.pipeline_mode<synchronous>, transform_indices = @transform_1, window_bounds = array<i64: 32, 96>}, {pipeline_mode = #tpu.pipeline_mode<synchronous>, transform_indices = @transform_2, window_bounds = array<i64: 1, 96>}, {transform_indices = @transform_3, window_bounds = array<i64: 8, 96>}]} {
    %c0 = arith.constant 0 : index
    %c0_0 = arith.constant 0 : index
    %0 = vector.load %arg1[%c0, %c0_0] : memref<8x32xf32, #tpu.memory_space<vmem>>, vector<8x32xf32>
    %c0_1 = arith.constant 0 : index
    %c0_2 = arith.constant 0 : index
    %1 = vector.load %arg2[%c0_1, %c0_2] : memref<32x96xf32, #tpu.memory_space<vmem>>, vector<32x96xf32>
    %cst = arith.constant dense<0.000000e+00> : vector<8x96xf32>
    %2 = tpu.matmul %0, %1, %cst {dimension_numbers = #tpu.dot_dimension_numbers<[1], [0], [0], [1], [0, 0, 1, 1], [], []>} : vector<8x32xf32>, vector<32x96xf32>, vector<8x96xf32> -> vector<8x96xf32>
    %c0_3 = arith.constant 0 : index
    %c0_4 = arith.constant 0 : index
    %3 = vector.load %arg3[%c0_3, %c0_4] : memref<1x96xf32, #tpu.memory_space<vmem>>, vector<1x96xf32>
    %4 = vector.broadcast %3 : vector<1x96xf32> to vector<8x96xf32>
    %5 = arith.addf %2, %4 : vector<8x96xf32>
    %c0_5 = arith.constant 0 : index
    %c0_6 = arith.constant 0 : index
    %6 = vector.load %arg4[%c0_5, %c0_6] : memref<8x96xf32, #tpu.memory_space<vmem>>, vector<8x96xf32>
    tpu.vector_store %arg4[%c0_5, %c0_6], %5 {strides = array<i32>} : memref<8x96xf32, #tpu.memory_space<vmem>>, vector<8x96xf32>,
    return
  }
  func.func @transform_0(%arg0: i32) -> (i32, i32) {
    %c0_i32 = arith.constant 0 : i32
    %c0_i32_0 = arith.constant 0 : i32
    return %arg0, %c0_i32 : i32, i32
  }
  func.func @transform_1(%arg0: i32) -> (i32, i32) {
    %c0_i32 = arith.constant 0 : i32
    %c0_i32_0 = arith.constant 0 : i32
    %c0_i32_1 = arith.constant 0 : i32
    return %c0_i32, %c0_i32_0 : i32, i32
  }
  func.func @transform_2(%arg0: i32) -> (i32, i32) {
    %c0_i32 = arith.constant 0 : i32
    %c0_i32_0 = arith.constant 0 : i32
    %c0_i32_1 = arith.constant 0 : i32
    return %c0_i32, %c0_i32_0 : i32, i32
  }
  func.func @transform_3(%arg0: i32) -> (i32, i32) {
    %c0_i32 = arith.constant 0 : i32
    %c0_i32_0 = arith.constant 0 : i32
    return %arg0, %c0_i32 : i32, i32
  }
}

</mosaic_0001>

<llo_original>
// kernel: ortho_projection_forward.1
$region0: #{ortho_projection_forward.1}
  #allocation0 [shape = 'u32[]', space=smem, size = 0x4, offset = 0x4, fixed_abs, tag = 'smem constant byte address 0x4 - core index']
  #allocation1 [shape = 'u32[144,128]{1,0:T(1,128)}', space=vmem, size = 0x12000, scoped, tag = 'internal scratch']
  %s0 = inlined_call_operand.hbm [shape: f32[4,32], index: 0, kind: input, shape index: {}]
  %s1 = inlined_call_operand.hbm [shape: f32[32,96], index: 1, kind: input, shape index: {}]
  %s2 = inlined_call_operand.vmem [shape: f32[1,96], index: 2, kind: input, shape index: {}]
  %s3 = inlined_call_operand.hbm [shape: f32[4,96], index: 3, kind: output, shape index: {}]
  %s4 = sld [smem:[#allocation0]]
  $region30: #{ortho_projection_forward.1} parent=0
    _
  %s6 = ssub.s32 1, %s4
  %s7 = scalar_select 0, %s6, %s4
  $region1: #{ortho_projection_forward.1} parent=0
    #allocation2 [shape = 'u8[4096]{0}', space=vmem, size = 0x1000, scoped, tag = 'input window, operand 0, single buffered']
    #allocation3 [shape = 's32[1]{0}', space=sflag, size = 0x4, scoped, tag = 'scoped memory for ortho_projection_forward.1']
    #allocation4 [shape = 's32[1]{0}', space=sflag, size = 0x4, scoped, tag = 'scoped memory for ortho_projection_forward.1']
    #allocation5 [shape = 'u8[16384]{0}', space=vmem, size = 0x4000, scoped, tag = 'input window, operand 1, single buffered']
    #allocation6 [shape = 's32[1]{0}', space=sflag, size = 0x4, scoped, tag = 'scoped memory for ortho_projection_forward.1']
    #allocation7 [shape = 'u8[4096]{0}', space=vmem, size = 0x1000, scoped, tag = 'output window, operand 0, single buffered']
    %8 = vsyncpa [#allocation3], 0
    %9 = vsyncpa [#allocation6], 0
    %10 = vsyncpa [#allocation4], 0
    // Predicated region
    $region2: #{ortho_projection_forward.1} parent=1 // pred_check
      _
    $region3: #{ortho_projection_forward.1} parent=1 // pred_check_branch
      %12 = sbr.rel (0) target = $region5
    $region4: #{ortho_projection_forward.1} parent=1 // pred_region
      %s14 = ssub.s32 128, 64
      %15 = vsyncadd [#allocation3], %s14
      %s16 = sshll.u32 [#allocation2], 4
      %s17 = int_to_ptr.vmem [resolvable:$true] %s16
      %22 = dma.hbm_to_vmem [thread:$0]  %s0, 64, %s17, [#allocation3], 64, 64, 4
    $region5: #{ortho_projection_forward.1} parent=1 // pred_fallthru
      _
    // Predicated region
    $region6: #{ortho_projection_forward.1} parent=1 // pred_check
      _
    $region7: #{ortho_projection_forward.1} parent=1 // pred_check_branch
      %24 = sbr.rel (0) target = $region9
    $region8: #{ortho_projection_forward.1} parent=1 // pred_region
      %s26 = ssub.s32 512, 512
      %27 = vsyncadd [#allocation6], %s26
      %s28 = sshll.u32 [#allocation5], 4
      %s29 = int_to_ptr.vmem [resolvable:$true] %s28
      %34 = dma.hbm_to_vmem [thread:$0]  %s1, 512, %s29, [#allocation6], 128, 128, 8
    $region9: #{ortho_projection_forward.1} parent=1 // pred_fallthru
      _
    // Predicated region
    $region10: #{ortho_projection_forward.1} parent=1 // pred_check
      _
    $region11: #{ortho_projection_forward.1} parent=1 // pred_check_branch
      %36 = sbr.rel (0) target = $region13
    $region12: #{ortho_projection_forward.1} parent=1 // pred_region
      _
    $region13: #{ortho_projection_forward.1} parent=1 // pred_fallthru
      _
    // Predicated region
    $region14: #{ortho_projection_forward.1} parent=1 // pred_check
      _
    $region15: #{ortho_projection_forward.1} parent=1 // pred_check_branch
      %38 = sbr.rel (0) target = $region17
    $region16: #{ortho_projection_forward.1} parent=1 // pred_region
      %39 = dma.done [#allocation3], 128
    $region17: #{ortho_projection_forward.1} parent=1 // pred_fallthru
      _
    // Predicated region
    $region18: #{ortho_projection_forward.1} parent=1 // pred_check
      _
    $region19: #{ortho_projection_forward.1} parent=1 // pred_check_branch
      %41 = sbr.rel (0) target = $region21
    $region20: #{ortho_projection_forward.1} parent=1 // pred_region
      %42 = dma.done [#allocation6], 512
    $region21: #{ortho_projection_forward.1} parent=1 // pred_fallthru
      _
    %v43 = vld [vmem:[#allocation2] sm:$0xff]
    %v44 = vld [vmem:[#allocation5] sm:$0xff]
    %v45 = vld [vmem:[#allocation5 + $0x8] sm:$0xff]
    %v46 = vld [vmem:[#allocation5 + $0x10] sm:$0xff]
    %v47 = vld [vmem:[#allocation5 + $0x18] sm:$0xff]
    %v48 = vld [vmem:[%s2] sm:$0x1]
    %v50 = vlaneseq
    %v51 = vshrl.u32 %v50, 7
    %v52 = vsub.s32 0, %v51
    %v53 = vrot.slane %v48, %v52
    %vm55 = vcmask 261120
    %v57 = vsel %vm55, %v43, 0
    %59 = vmatprep.subr.mxu0 0.0
    %60 = vmatpush1.msra.mxu0 %v44
    %61 = vmatprep.subr.mxu0 0.0
    %62 = vmatpush1.msra.mxu0 %v45
    %63 = vmatprep.subr.mxu0 0.0
    %64 = vmatpush1.msra.mxu0 %v46
    %65 = vmatprep.subr.mxu0 0.0
    %66 = vmatpush1.msra.mxu0 %v47
    %67 = vmatprep.subr.mxu0 0.0
    %68 = vmatpush1.msra.mxu0 0.0
    %69 = vmatprep.subr.mxu0 0.0
    %70 = vmatpush1.msra.mxu0 0.0
    %71 = vmatprep.subr.mxu0 0.0
    %72 = vmatpush1.msra.mxu0 0.0
    %73 = vmatprep.subr.mxu0 0.0
    %74 = vmatpush1.msra.mxu0 0.0
    %75 = vmatprep.subr.mxu0 0.0
    %76 = vmatpush1.msra.mxu0 0.0
    %77 = vmatprep.subr.mxu0 0.0
    %78 = vmatpush1.msra.mxu0 0.0
    %79 = vmatprep.subr.mxu0 0.0
    %80 = vmatpush1.msra.mxu0 0.0
    %81 = vmatprep.subr.mxu0 0.0
    %82 = vmatpush1.msra.mxu0 0.0
    %83 = vmatprep.subr.mxu0 0.0
    %84 = vmatpush1.msra.mxu0 0.0
    %85 = vmatprep.subr.mxu0 0.0
    %86 = vmatpush1.msra.mxu0 0.0
    %87 = vmatprep.subr.mxu0 0.0
    %88 = vmatpush1.msra.mxu0 0.0
    %89 = vmatprep.subr.mxu0 0.0
    %90 = vmatpush1.msra.mxu0 0.0
    %91 = vmatprep.subr.mxu0 0.0
    %92 = vmatpush1.msra.mxu0 0.0
    %93 = vmatprep.subr.mxu0 0.0
    %94 = vmatpush1.msra.mxu0 0.0
    %95 = vmatprep.subr.mxu0 0.0
    %96 = vmatpush1.msra.mxu0 0.0
    %97 = vmatprep.subr.mxu0 0.0
    %98 = vmatpush1.msra.mxu0 0.0
    %99 = vmatprep.subr.mxu0 0.0
    %100 = vmatpush1.msra.mxu0 0.0
    %101 = vmatprep.subr.mxu0 0.0
    %102 = vmatpush1.msra.mxu0 0.0
    %103 = vmatprep.subr.mxu0 0.0
    %104 = vmatpush1.msra.mxu0 0.0
    %105 = vmatprep.subr.mxu0 0.0
    %106 = vmatpush1.msra.mxu0 0.0
    %107 = vmatprep.subr.mxu0 0.0
    %108 = vmatpush1.msra.mxu0 0.0
    %109 = vmatprep.subr.mxu0 0.0
    %110 = vmatpush1.msra.mxu0 0.0
    %111 = vmatprep.subr.mxu0 0.0
    %112 = vmatpush1.msra.mxu0 0.0
    %113 = vmatprep.subr.mxu0 0.0
    %114 = vmatpush1.msra.mxu0 0.0
    %115 = vmatprep.subr.mxu0 0.0
    %116 = vmatpush1.msra.mxu0 0.0
    %117 = vmatprep.subr.mxu0 0.0
    %118 = vmatpush1.msra.mxu0 0.0
    %119 = vmatprep.subr.mxu0 0.0
    %120 = vmatpush1.msra.mxu0 0.0
    %121 = vmatprep.subr.mxu0 0.0
    %122 = vmatpush1.msra.mxu0 0.0
    %123 = vmatprep.mubr.f32.mxu0 0.0
    %124 = vmatmul.mubr.f32.gmra.mrb[0].mxu0 %v57
    %v125 = vpop.f32.mrb[0].mxu0
    %v126 = vadd.f32 %v53, %v125
    %v127 = vpop.f32.mrb[0].mxu0
    %128 = vdwg.mxu0
    %vm129 = vcmask 785408
    %130 = vst.msk [vmem:[#allocation7] sm:$0xff] %vm129, %v126
    // Predicated region
    $region22: #{ortho_projection_forward.1} parent=1 // pred_check
      _
    $region23: #{ortho_projection_forward.1} parent=1 // pred_check_branch
      %132 = sbr.rel (0) target = $region25
    $region24: #{ortho_projection_forward.1} parent=1 // pred_region
      %s134 = ssub.s32 128, 64
      %135 = vsyncadd [#allocation4], %s134
      %s136 = sshll.u32 [#allocation7], 4
      %s137 = int_to_ptr.vmem [resolvable:$true] %s136
      %142 = dma.vmem_to_hbm [thread:$0]  %s137, 64, %s3, [#allocation4], 64, 64, 4
    $region25: #{ortho_projection_forward.1} parent=1 // pred_fallthru
      _
    // Predicated region
    $region26: #{ortho_projection_forward.1} parent=1 // pred_check
      _
    $region27: #{ortho_projection_forward.1} parent=1 // pred_check_branch
      %144 = sbr.rel (0) target = $region29
    $region28: #{ortho_projection_forward.1} parent=1 // pred_region
      %145 = dma.done [#allocation4], 128
    $region29: #{ortho_projection_forward.1} parent=1 // pred_fallthru
      _
    %146 = vsyncpa [#allocation3], 1
    %147 = vsyncpa [#allocation6], 1
    %148 = vsyncpa [#allocation4], 1

</llo_original>
